<compile_context>
chip_gen: v6e
topology: v6e:2x2x1
jax: 0.10.0
libtpu: 0.0.40
codegen_flags: <defaults>
</compile_context>

<pallas_src>
import math

import jax
import jax.numpy as jnp
from jax.experimental import pallas as pl
from jax.experimental.pallas import tpu as pltpu


def _pick_lane(total):
    """Largest lane width (multiple of 128) dividing `total`, preferring >=8 rows."""
    for cand in (4096, 2048, 1024, 512, 256, 128):
        if total % cand == 0 and total // cand >= 8:
            return cand
    for cand in (4096, 2048, 1024, 512, 256, 128):
        if total % cand == 0:
            return cand
    return None


def _row_chunks(rows, max_chunks=8, row_align=8):
    """Split [0, rows) into <= max_chunks contiguous (offset, size) chunks.

    Every chunk except possibly the last is a multiple of `row_align` rows so
    chunk boundaries stay sublane-friendly.  Static Python ints only (the DMA
    descriptors are built at trace time).
    """
    per = -(-rows // max_chunks)                         # ceil(rows / max_chunks)
    per = max(row_align, -(-per // row_align) * row_align)
    chunks = []
    off = 0
    while off < rows:
        sz = min(per, rows - off)
        chunks.append((off, sz))
        off += sz
    return chunks


def _make_hbm_copy_kernel(chunks):
    """Kernel: start all HBM->HBM chunk DMAs back-to-back, then wait on all."""

    def kernel(x_ref, o_ref, sem):
        copies = []
        for i, (off, sz) in enumerate(chunks):
            cp = pltpu.make_async_copy(
                x_ref.at[pl.ds(off, sz)],
                o_ref.at[pl.ds(off, sz)],
                sem.at[i],
            )
            cp.start()
            copies.append(cp)
        for cp in copies:
            cp.wait()

    return kernel


def _pallas_materialized_reshape(x, out_shape):
    """Reshape x to out_shape, materializing a fresh buffer via HBM->HBM DMA."""
    total = math.prod(x.shape)
    if total == 0:
        return x.reshape(out_shape)
    itemsize = jnp.dtype(x.dtype).itemsize

    lane = _pick_lane(total)
    if lane is not None:
        # Lane-dense 2D view; split the row axis into <=8 DMA chunks so the
        # DMA engines can overlap and saturate HBM bandwidth.
        rows = total // lane
        work_shape = (rows, lane)
        chunks = _row_chunks(rows)
    else:
        # Element count not a multiple of 128: still materialize (correctness
        # feedback) with a single whole-array DMA over the original shape.
        work_shape = x.shape
        chunks = [(0, work_shape[0])]

    x_w = x.reshape(work_shape)

    y_w = pl.pallas_call(
        _make_hbm_copy_kernel(chunks),
        out_shape=jax.ShapeDtypeStruct(work_shape, x.dtype),
        in_specs=[pl.BlockSpec(memory_space=pl.ANY)],
        out_specs=pl.BlockSpec(memory_space=pl.ANY),
        scratch_shapes=[pltpu.SemaphoreType.DMA((len(chunks),))],
        cost_estimate=pl.CostEstimate(
            flops=0, transcendentals=0, bytes_accessed=2 * total * itemsize),
    )(x_w)

    return y_w.reshape(out_shape)


class Reshape:
    """JAX/Pallas port of the PyTorch Reshape module.

    materialize=False -> metadata-only reshape (zero data movement; exact
                         analogue of torch .view on a contiguous tensor).
    materialize=True  -> values are additionally pushed through a direct
                         HBM->HBM DMA copy kernel that materializes a fresh
                         buffer (always, even for non-128-divisible totals).
    """

    def __init__(self, size, materialize=True):
        self.size = tuple(size)
        self.materialize = materialize

    def __call__(self, x):
        if x.ndim == 4:
            # PyTorch: 4-D inputs are returned unchanged.
            return x
        batch = x.shape[0]
        flat = math.prod(x.shape[1:])
        assert flat == math.prod(self.size), (
            f"cannot view {x.shape} as ({batch}, *{self.size})")
        out_shape = (batch,) + self.size
        if not self.materialize:
            return x.reshape(out_shape)            # metadata-only (free)
        return _pallas_materialized_reshape(x, out_shape)


if __name__ == "__main__":
    key = jax.random.PRNGKey(0)
    k1, k2, k3, k4 = jax.random.split(key, 4)

    # Case 1: non-4-D input -> reshaped to (batch, *size) via HBM->HBM DMA copy.
    size = (4, 16, 16)                              # target C, H, W
    x = jax.random.normal(k1, (2, 4 * 16 * 16), dtype=jnp.float32)
    mod = Reshape(size)                             # materialize=True -> Pallas kernel
    y = jax.block_until_ready(mod(x))
    assert y.shape == (2, 4, 16, 16)
    assert jnp.array_equal(y, x.reshape(2, 4, 16, 16))

    # Case 1b: zero-copy (metadata-only) path.
    y_fast = jax.block_until_ready(Reshape(size, materialize=False)(x))
    assert y_fast.shape == (2, 4, 16, 16)
    assert jnp.array_equal(y_fast, y)

    # Case 2: larger input that exercises the multi-chunk DMA path
    # (total = 65536 elems -> lane 4096, rows 16 -> 2 chunks of 8 rows).
    x_big = jax.random.normal(k2, (16, 4096), dtype=jnp.float32)
    mod_big = Reshape((4, 32, 32))
    y_big = jax.block_until_ready(mod_big(x_big))
    assert y_big.shape == (16, 4, 32, 32)
    assert jnp.array_equal(y_big, x_big.reshape(16, 4, 32, 32))

    # Case 3: element count NOT a multiple of 128 -> still materialized
    # (single whole-array DMA), per correctness feedback.
    x_odd = jax.random.normal(k3, (2, 3 * 5 * 7), dtype=jnp.float32)
    mod_odd = Reshape((3, 5, 7))
    y_odd = jax.block_until_ready(mod_odd(x_odd))
    assert y_odd.shape == (2, 3, 5, 7)
    assert jnp.array_equal(y_odd, x_odd.reshape(2, 3, 5, 7))

    # Case 4: 4-D input -> passthrough.
    x4 = jax.random.normal(k4, (2, 4, 16, 16), dtype=jnp.float32)
    y4 = jax.block_until_ready(mod(x4))
    assert y4.shape == x4.shape
    assert jnp.array_equal(y4, x4)

    print("KERNEL_OK")
</pallas_src>

<mosaic_0001>
module attributes {stable_mosaic.version = 11 : i64} {
  func.func @kernel(%arg0: memref<8x256xf32, #tpu.memory_space<any>>, %arg1: memref<8x256xf32, #tpu.memory_space<any>>, %arg2: memref<1x!tpu.dma_semaphore, #tpu.memory_space<semaphore_mem>>) attributes {dimension_semantics = [], scalar_prefetch = 0 : i64, scratch_operands = 1 : i64, tpu.core_type = #tpu.core_type<tc>} {
    %c0_i32 = arith.constant 0 : i32
    %c0_i32_0 = arith.constant 0 : i32
    %c0_i32_1 = arith.constant 0 : i32
    %0 = tpu.memref_slice %arg0[%c0_i32_0, %c0_i32_1] : memref<8x256xf32, #tpu.memory_space<any>> -> memref<8x256xf32, #tpu.memory_space<any>>
    %c0_i32_2 = arith.constant 0 : i32
    %c0_i32_3 = arith.constant 0 : i32
    %1 = tpu.memref_slice %arg1[%c0_i32_2, %c0_i32_3] : memref<8x256xf32, #tpu.memory_space<any>> -> memref<8x256xf32, #tpu.memory_space<any>>
    %2 = tpu.memref_slice %arg2[%c0_i32] : memref<1x!tpu.dma_semaphore, #tpu.memory_space<semaphore_mem>> -> memref<1x!tpu.dma_semaphore, #tpu.memory_space<semaphore_mem>>
    %3 = tpu.memref_squeeze %2 : memref<1x!tpu.dma_semaphore, #tpu.memory_space<semaphore_mem>> -> memref<!tpu.dma_semaphore, #tpu.memory_space<semaphore_mem>>
    tpu.enqueue_dma source(%0 : memref<8x256xf32, #tpu.memory_space<any>>) target(%1 : memref<8x256xf32, #tpu.memory_space<any>>) target_semaphore(%3 : memref<!tpu.dma_semaphore, #tpu.memory_space<semaphore_mem>>)
    %c0_i32_4 = arith.constant 0 : i32
    %c0_i32_5 = arith.constant 0 : i32
    %c0_i32_6 = arith.constant 0 : i32
    %4 = tpu.memref_slice %arg0[%c0_i32_5, %c0_i32_6] : memref<8x256xf32, #tpu.memory_space<any>> -> memref<8x256xf32, #tpu.memory_space<any>>
    %c0_i32_7 = arith.constant 0 : i32
    %c0_i32_8 = arith.constant 0 : i32
    %5 = tpu.memref_slice %arg1[%c0_i32_7, %c0_i32_8] : memref<8x256xf32, #tpu.memory_space<any>> -> memref<8x256xf32, #tpu.memory_space<any>>
    %6 = tpu.memref_slice %arg2[%c0_i32_4] : memref<1x!tpu.dma_semaphore, #tpu.memory_space<semaphore_mem>> -> memref<1x!tpu.dma_semaphore, #tpu.memory_space<semaphore_mem>>
    %7 = tpu.memref_squeeze %6 : memref<1x!tpu.dma_semaphore, #tpu.memory_space<semaphore_mem>> -> memref<!tpu.dma_semaphore, #tpu.memory_space<semaphore_mem>>
    tpu.wait_dma2 semaphore(%7 : memref<!tpu.dma_semaphore, #tpu.memory_space<semaphore_mem>>) src(%4 : memref<8x256xf32, #tpu.memory_space<any>>) dst(%5 : memref<8x256xf32, #tpu.memory_space<any>>)
    return
  }
}

</mosaic_0001>

<llo_original>
// kernel: tpu_custom_call.1
$region0: #{tpu_custom_call.1}
  #allocation0 [shape = 'u32[]', space=smem, size = 0x4, offset = 0x4, fixed_abs, tag = 'smem constant byte address 0x4 - core index']
  #allocation1 [shape = 'u32[144,128]{1,0:T(1,128)}', space=vmem, size = 0x12000, scoped, tag = 'internal scratch']
  #allocation2 [shape = 's32[1]{0}', space=sflag, size = 0x4, scoped, tag = 'scratch operand']
  #allocation3 [shape = 's32[]', space=sflag, size = 0x4, offset = 0, fixed_abs, tag = 'sflag constant byte address 0x0 - dummy sync flag']
  #allocation4 [shape = 'u32[0]{0}', space=smem, size = 0, offset = 0, fixed_abs, tag = 'smem constant byte address 0x0 - null']
  %s0 = inlined_call_operand.hbm [shape: f32[8,256], index: 0, kind: input, shape index: {}]
  %s1 = inlined_call_operand.hbm [shape: f32[8,256], index: 1, kind: output, shape index: {}]
  %s2 = sld [smem:[#allocation0]]
  $region2: #{tpu_custom_call.1} parent=0
    _
  %s4 = ssub.s32 1, %s2
  %s5 = scalar_select 0, %s4, %s2
  %s7 = sshll.u32 1, 14
  %s8 = sxor.u32 4294967295, %s7
  %12 = dma.general %s0, 256, %s1, [#allocation2], 131072, [#allocation4], 0, 0
  %s13 = smul.u32 8, 1
  %s14 = smul.u32 %s13, 2
  %s15 = sshll.u32 %s14, 4
  %16 = dma.done [#allocation2], %s15
  %17 = vsyncmov [#allocation2]
  %s18 = vpop.sfrf %17
  %p19 = scmp.eq.s32.totalorder %s18, 0
  %p20 = pneg %p19
  %22 = shalt.err (%p20)

</llo_original>
